<compile_context>
chip_gen: v5e
topology: v5e:2x2
jax: 0.10.0
libtpu: 0.0.40
codegen_flags: <defaults>
</compile_context>

<pallas_src>
import jax
import jax.numpy as jnp
from jax import lax
from jax.experimental import pallas as pl
from jax.experimental.pallas import tpu as pltpu


def fraud_detector_kernel(x_ref,
                          w1_ref, b1_ref,
                          w2_ref, b2_ref,
                          w3_ref, b3_ref,
                          w4_ref, b4_ref,
                          o_ref):
    """Fused 4-layer MLP + sigmoid on one batch tile.

    x_ref:  (Bt, F)   batch-major input tile (no wrapper-side transpose)
    wN_ref: (out, in) torch-native weight layout
    bN_ref: (out, 1)  bias, broadcast over lanes
    o_ref:  (1, Bt)   sigmoid probabilities for this tile (lane-dense store)
    """
    x = x_ref[...]  # (Bt, F), f32

    # Layer 1: fold the batch->lane transpose into the MXU op:
    # (64, F) . (Bt, F)^T -> (64, Bt). Batch is on lanes from here on.
    h = lax.dot_general(w1_ref[...], x,
                        dimension_numbers=(((1,), (1,)), ((), ())),
                        preferred_element_type=jnp.float32)
    h = jnp.maximum(h + b1_ref[...], 0.0)
    # Dropout(0.3): identity at inference.

    # Layer 2: (32,64) @ (64,Bt) -> ReLU
    h = jnp.dot(w2_ref[...], h, preferred_element_type=jnp.float32)
    h = jnp.maximum(h + b2_ref[...], 0.0)
    # Dropout(0.2): identity at inference.

    # Layer 3: (16,32) @ (32,Bt) -> ReLU
    h = jnp.dot(w3_ref[...], h, preferred_element_type=jnp.float32)
    h = jnp.maximum(h + b3_ref[...], 0.0)

    # Layer 4: (1,16) @ (16,Bt) + bias -> exact sigmoid (EUP; free on a (1,Bt) row).
    logits = jnp.dot(w4_ref[...], h, preferred_element_type=jnp.float32) + b4_ref[...]
    o_ref[...] = jax.nn.sigmoid(logits).astype(o_ref.dtype)


def _round_up(n: int, m: int) -> int:
    return ((n + m - 1) // m) * m


def fraud_detector_forward(x, params, *, btile=4096):
    """x: (B, input_dim) float32. params: torch-native (out,in) weights, (out,1) biases.

    Returns (B, 1) probabilities, matching FraudDetector.forward in eval mode.
    btile: batch tile; multiple of 256. Default 4096 (review-recommended 2K-8K range;
    well under v7x's 32 MiB scoped VMEM and gives >=2 grid steps for its 2 TCs once
    B >= 8192). Clamped down for small batches to avoid useless padding work.
    """
    B, F = x.shape
    w1, b1 = params["w1"], params["b1"]
    w2, b2 = params["w2"], params["b2"]
    w3, b3 = params["w3"], params["b3"]
    w4, b4 = params["w4"], params["b4"]

    # Tile selection: multiple of 256, never (much) larger than the batch itself.
    btile = max(256, min(_round_up(btile, 256), _round_up(B, 256)))
    n_tiles = pl.cdiv(B, btile)
    b_pad = n_tiles * btile

    x = x.astype(jnp.float32)
    if b_pad != B:
        # Only the tiny batch-major (B, F) array is padded, and only when needed.
        x = jnp.pad(x, ((0, b_pad - B), (0, 0)))

    # Parameters: full-array blocks with constant index maps -> VMEM-resident
    # across all batch tiles (DMA'd once, ~150 KB total incl. double-buffering).
    resident = lambda a: pl.BlockSpec(a.shape, lambda i: (0, 0))

    # Rough per-step VMEM: double-buffered x/out tiles + f32 intermediates + params.
    # Only raise the scoped limit when a very large btile would exceed v5e's 16 MiB
    # default (safe value for all of v5e/v6e/v7x).
    est_bytes = btile * 4 * (2 * (F + 1) + 64 + 32 + 16 + 1) + (1 << 20)
    vmem_limit = 32 * 1024 * 1024 if est_bytes > 12 * 1024 * 1024 else None

    outT = pl.pallas_call(
        fraud_detector_kernel,
        out_shape=jax.ShapeDtypeStruct((1, b_pad), jnp.float32),
        grid=(n_tiles,),
        in_specs=[
            pl.BlockSpec((btile, F), lambda i: (i, 0)),   # streaming batch-major x tile
            resident(w1), resident(b1),
            resident(w2), resident(b2),
            resident(w3), resident(b3),
            resident(w4), resident(b4),
        ],
        out_specs=pl.BlockSpec((1, btile), lambda i: (0, i)),  # lane-dense output
        compiler_params=pltpu.CompilerParams(
            dimension_semantics=("parallel",),   # megacore sharding on v7x
            vmem_limit_bytes=vmem_limit,
        ),
    )(x, w1, b1, w2, b2, w3, b3, w4, b4)

    # Drop batch padding and return batch-major (B, 1) like the torch module.
    return outT[:, :B].T


def xavier_uniform(key, fan_out, fan_in, dtype=jnp.float32):
    """Matches torch.nn.init.xavier_uniform_ (gain=1), torch-native (out,in) layout."""
    limit = jnp.sqrt(6.0 / (fan_in + fan_out))
    return jax.random.uniform(key, (fan_out, fan_in), dtype=dtype,
                              minval=-limit, maxval=limit)


def init_params(key, input_dim=4):
    dims = [(input_dim, 64), (64, 32), (32, 16), (16, 1)]
    keys = jax.random.split(key, len(dims))
    params = {}
    for i, ((fin, fout), k) in enumerate(zip(dims, keys), start=1):
        params[f"w{i}"] = xavier_uniform(k, fout, fin)                 # (out, in)
        params[f"b{i}"] = jnp.zeros((fout, 1), dtype=jnp.float32)      # zeros like torch
    return params


def reference_forward(x, params):
    """Pure-JAX reference (batch-major) for correctness checking."""
    h = jnp.maximum(x @ params["w1"].T + params["b1"].T, 0.0)
    h = jnp.maximum(h @ params["w2"].T + params["b2"].T, 0.0)
    h = jnp.maximum(h @ params["w3"].T + params["b3"].T, 0.0)
    return jax.nn.sigmoid(h @ params["w4"].T + params["b4"].T)


if __name__ == "__main__":
    key = jax.random.PRNGKey(0)
    k_params, k_x = jax.random.split(key)

    input_dim = 4
    params = init_params(k_params, input_dim=input_dim)

    # Primary run: batch deliberately not a multiple of 256 (exercises padding path).
    batch = 300
    x = jax.random.normal(k_x, (batch, input_dim), dtype=jnp.float32)
    out = jax.block_until_ready(fraud_detector_forward(x, params))
    ref = reference_forward(x, params)
    assert out.shape == (batch, 1), out.shape
    assert jnp.allclose(out, ref, atol=1e-4, rtol=0.0), float(jnp.max(jnp.abs(out - ref)))
    assert bool(jnp.all((out >= 0.0) & (out <= 1.0)))

    # Multi-tile run: forces grid > 1 with an explicit small tile.
    x2 = jax.random.normal(jax.random.PRNGKey(1), (600, input_dim), dtype=jnp.float32)
    out2 = jax.block_until_ready(fraud_detector_forward(x2, params, btile=256))
    ref2 = reference_forward(x2, params)
    assert out2.shape == (600, 1), out2.shape
    assert jnp.allclose(out2, ref2, atol=1e-4, rtol=0.0), float(jnp.max(jnp.abs(out2 - ref2)))

    print("KERNEL_OK")
</pallas_src>

<mosaic_0001>
module attributes {stable_mosaic.version = 11 : i64} {
  func.func @fraud_detector_kernel(%arg0: i32, %arg1: memref<512x4xf32, #tpu.memory_space<vmem>>, %arg2: memref<64x4xf32, #tpu.memory_space<vmem>>, %arg3: memref<64x1xf32, #tpu.memory_space<vmem>>, %arg4: memref<32x64xf32, #tpu.memory_space<vmem>>, %arg5: memref<32x1xf32, #tpu.memory_space<vmem>>, %arg6: memref<16x32xf32, #tpu.memory_space<vmem>>, %arg7: memref<16x1xf32, #tpu.memory_space<vmem>>, %arg8: memref<1x16xf32, #tpu.memory_space<vmem>>, %arg9: memref<1x1xf32, #tpu.memory_space<vmem>>, %arg10: memref<1x512xf32, #tpu.memory_space<vmem>>) attributes {dimension_semantics = [#tpu.dimension_semantics<parallel>], iteration_bounds = array<i64: 1>, scalar_prefetch = 0 : i64, scratch_operands = 0 : i64, tpu.core_type = #tpu.core_type<tc>, window_params = [{transform_indices = @transform_0, window_bounds = array<i64: 512, 4>}, {pipeline_mode = #tpu.pipeline_mode<synchronous>, transform_indices = @transform_1, window_bounds = array<i64: 64, 4>}, {pipeline_mode = #tpu.pipeline_mode<synchronous>, transform_indices = @transform_2, window_bounds = array<i64: 64, 1>}, {pipeline_mode = #tpu.pipeline_mode<synchronous>, transform_indices = @transform_3, window_bounds = array<i64: 32, 64>}, {pipeline_mode = #tpu.pipeline_mode<synchronous>, transform_indices = @transform_4, window_bounds = array<i64: 32, 1>}, {pipeline_mode = #tpu.pipeline_mode<synchronous>, transform_indices = @transform_5, window_bounds = array<i64: 16, 32>}, {pipeline_mode = #tpu.pipeline_mode<synchronous>, transform_indices = @transform_6, window_bounds = array<i64: 16, 1>}, {pipeline_mode = #tpu.pipeline_mode<synchronous>, transform_indices = @transform_7, window_bounds = array<i64: 1, 16>}, {pipeline_mode = #tpu.pipeline_mode<synchronous>, transform_indices = @transform_8, window_bounds = array<i64: 1, 1>}, {transform_indices = @transform_9, window_bounds = array<i64: 1, 512>}]} {
    %c0 = arith.constant 0 : index
    %c0_0 = arith.constant 0 : index
    %0 = vector.load %arg1[%c0, %c0_0] : memref<512x4xf32, #tpu.memory_space<vmem>>, vector<512x4xf32>
    %c0_1 = arith.constant 0 : index
    %c0_2 = arith.constant 0 : index
    %1 = vector.load %arg2[%c0_1, %c0_2] : memref<64x4xf32, #tpu.memory_space<vmem>>, vector<64x4xf32>
    %cst = arith.constant dense<0.000000e+00> : vector<64x512xf32>
    %2 = tpu.matmul %1, %0, %cst {dimension_numbers = #tpu.dot_dimension_numbers<[1], [1], [0], [0], [0, 0, 1, 0], [], []>} : vector<64x4xf32>, vector<512x4xf32>, vector<64x512xf32> -> vector<64x512xf32>
    %c0_3 = arith.constant 0 : index
    %c0_4 = arith.constant 0 : index
    %3 = vector.load %arg3[%c0_3, %c0_4] : memref<64x1xf32, #tpu.memory_space<vmem>>, vector<64x1xf32>
    %4 = vector.broadcast %3 : vector<64x1xf32> to vector<64x512xf32>
    %5 = arith.addf %2, %4 : vector<64x512xf32>
    %cst_5 = arith.constant 0.000000e+00 : f32
    %6 = vector.broadcast %cst_5 : f32 to vector<64x512xf32>
    %7 = arith.maximumf %5, %6 : vector<64x512xf32>
    %c0_6 = arith.constant 0 : index
    %c0_7 = arith.constant 0 : index
    %8 = vector.load %arg4[%c0_6, %c0_7] : memref<32x64xf32, #tpu.memory_space<vmem>>, vector<32x64xf32>
    %cst_8 = arith.constant dense<0.000000e+00> : vector<32x512xf32>
    %9 = tpu.matmul %8, %7, %cst_8 {dimension_numbers = #tpu.dot_dimension_numbers<[1], [0], [0], [1], [0, 0, 1, 1], [], []>} : vector<32x64xf32>, vector<64x512xf32>, vector<32x512xf32> -> vector<32x512xf32>
    %c0_9 = arith.constant 0 : index
    %c0_10 = arith.constant 0 : index
    %10 = vector.load %arg5[%c0_9, %c0_10] : memref<32x1xf32, #tpu.memory_space<vmem>>, vector<32x1xf32>
    %11 = vector.broadcast %10 : vector<32x1xf32> to vector<32x512xf32>
    %12 = arith.addf %9, %11 : vector<32x512xf32>
    %cst_11 = arith.constant 0.000000e+00 : f32
    %13 = vector.broadcast %cst_11 : f32 to vector<32x512xf32>
    %14 = arith.maximumf %12, %13 : vector<32x512xf32>
    %c0_12 = arith.constant 0 : index
    %c0_13 = arith.constant 0 : index
    %15 = vector.load %arg6[%c0_12, %c0_13] : memref<16x32xf32, #tpu.memory_space<vmem>>, vector<16x32xf32>
    %cst_14 = arith.constant dense<0.000000e+00> : vector<16x512xf32>
    %16 = tpu.matmul %15, %14, %cst_14 {dimension_numbers = #tpu.dot_dimension_numbers<[1], [0], [0], [1], [0, 0, 1, 1], [], []>} : vector<16x32xf32>, vector<32x512xf32>, vector<16x512xf32> -> vector<16x512xf32>
    %c0_15 = arith.constant 0 : index
    %c0_16 = arith.constant 0 : index
    %17 = vector.load %arg7[%c0_15, %c0_16] : memref<16x1xf32, #tpu.memory_space<vmem>>, vector<16x1xf32>
    %18 = vector.broadcast %17 : vector<16x1xf32> to vector<16x512xf32>
    %19 = arith.addf %16, %18 : vector<16x512xf32>
    %cst_17 = arith.constant 0.000000e+00 : f32
    %20 = vector.broadcast %cst_17 : f32 to vector<16x512xf32>
    %21 = arith.maximumf %19, %20 : vector<16x512xf32>
    %c0_18 = arith.constant 0 : index
    %c0_19 = arith.constant 0 : index
    %22 = vector.load %arg8[%c0_18, %c0_19] : memref<1x16xf32, #tpu.memory_space<vmem>>, vector<1x16xf32>
    %cst_20 = arith.constant dense<0.000000e+00> : vector<1x512xf32>
    %23 = tpu.matmul %22, %21, %cst_20 {dimension_numbers = #tpu.dot_dimension_numbers<[1], [0], [0], [1], [0, 0, 1, 1], [], []>} : vector<1x16xf32>, vector<16x512xf32>, vector<1x512xf32> -> vector<1x512xf32>
    %c0_21 = arith.constant 0 : index
    %c0_22 = arith.constant 0 : index
    %24 = vector.load %arg9[%c0_21, %c0_22] : memref<1x1xf32, #tpu.memory_space<vmem>>, vector<1x1xf32>
    %25 = vector.broadcast %24 : vector<1x1xf32> to vector<1x512xf32>
    %26 = arith.addf %23, %25 : vector<1x512xf32>
    %27 = arith.negf %26 : vector<1x512xf32>
    %28 = math.exp %27 : vector<1x512xf32>
    %cst_23 = arith.constant 1.000000e+00 : f32
    %29 = vector.broadcast %cst_23 : f32 to vector<1x512xf32>
    %30 = arith.addf %29, %28 : vector<1x512xf32>
    %31 = arith.divf %29, %30 : vector<1x512xf32>
    %c0_24 = arith.constant 0 : index
    %c0_25 = arith.constant 0 : index
    %32 = vector.load %arg10[%c0_24, %c0_25] : memref<1x512xf32, #tpu.memory_space<vmem>>, vector<1x512xf32>
    tpu.vector_store %arg10[%c0_24, %c0_25], %31 {strides = array<i32>} : memref<1x512xf32, #tpu.memory_space<vmem>>, vector<1x512xf32>,
    return
  }
  func.func @transform_0(%arg0: i32) -> (i32, i32) {
    %c0_i32 = arith.constant 0 : i32
    %c0_i32_0 = arith.constant 0 : i32
    return %arg0, %c0_i32 : i32, i32
  }
  func.func @transform_1(%arg0: i32) -> (i32, i32) {
    %c0_i32 = arith.constant 0 : i32
    %c0_i32_0 = arith.constant 0 : i32
    %c0_i32_1 = arith.constant 0 : i32
    return %c0_i32, %c0_i32_0 : i32, i32
  }
  func.func @transform_2(%arg0: i32) -> (i32, i32) {
    %c0_i32 = arith.constant 0 : i32
    %c0_i32_0 = arith.constant 0 : i32
    %c0_i32_1 = arith.constant 0 : i32
    return %c0_i32, %c0_i32_0 : i32, i32
  }
  func.func @transform_3(%arg0: i32) -> (i32, i32) {
    %c0_i32 = arith.constant 0 : i32
    %c0_i32_0 = arith.constant 0 : i32
    %c0_i32_1 = arith.constant 0 : i32
    return %c0_i32, %c0_i32_0 : i32, i32
  }
  func.func @transform_4(%arg0: i32) -> (i32, i32) {
    %c0_i32 = arith.constant 0 : i32
    %c0_i32_0 = arith.constant 0 : i32
    %c0_i32_1 = arith.constant 0 : i32
    return %c0_i32, %c0_i32_0 : i32, i32
  }
  func.func @transform_5(%arg0: i32) -> (i32, i32) {
    %c0_i32 = arith.constant 0 : i32
    %c0_i32_0 = arith.constant 0 : i32
    %c0_i32_1 = arith.constant 0 : i32
    return %c0_i32, %c0_i32_0 : i32, i32
  }
  func.func @transform_6(%arg0: i32) -> (i32, i32) {
    %c0_i32 = arith.constant 0 : i32
    %c0_i32_0 = arith.constant 0 : i32
    %c0_i32_1 = arith.constant 0 : i32
    return %c0_i32, %c0_i32_0 : i32, i32
  }
  func.func @transform_7(%arg0: i32) -> (i32, i32) {
    %c0_i32 = arith.constant 0 : i32
    %c0_i32_0 = arith.constant 0 : i32
    %c0_i32_1 = arith.constant 0 : i32
    return %c0_i32, %c0_i32_0 : i32, i32
  }
  func.func @transform_8(%arg0: i32) -> (i32, i32) {
    %c0_i32 = arith.constant 0 : i32
    %c0_i32_0 = arith.constant 0 : i32
    %c0_i32_1 = arith.constant 0 : i32
    return %c0_i32, %c0_i32_0 : i32, i32
  }
  func.func @transform_9(%arg0: i32) -> (i32, i32) {
    %c0_i32 = arith.constant 0 : i32
    %c0_i32_0 = arith.constant 0 : i32
    return %c0_i32, %arg0 : i32, i32
  }
}

</mosaic_0001>

<llo_original>
// kernel: tpu_custom_call.1
$region0: #{tpu_custom_call.1}
  #allocation0 [shape = 'u32[]', space=smem, size = 0x4, offset = 0x4, fixed_abs, tag = 'smem constant byte address 0x4 - core index']
  #allocation1 [shape = 'u32[72,128]{1,0:T(1,128)}', space=vmem, size = 0x9000, scoped, tag = 'internal scratch']
  #allocation2 [shape = 'f32[1,1]{1,0:T(1,128)S(1)}', space=vmem, size = 0x200, scoped, tag = 'scoped memory for tpu_custom_call.1']
  %s0 = inlined_call_operand.vmem [shape: f32[512,4], index: 0, kind: input, shape index: {}]
  %s1 = inlined_call_operand.vmem [shape: f32[64,4], index: 1, kind: input, shape index: {}]
  %s2 = inlined_call_operand.vmem [shape: f32[64,1], index: 2, kind: input, shape index: {}]
  %s3 = inlined_call_operand.vmem [shape: f32[32,64], index: 3, kind: input, shape index: {}]
  %s4 = inlined_call_operand.vmem [shape: f32[32,1], index: 4, kind: input, shape index: {}]
  %s5 = inlined_call_operand.vmem [shape: f32[16,32], index: 5, kind: input, shape index: {}]
  %s6 = inlined_call_operand.vmem [shape: f32[16,1], index: 6, kind: input, shape index: {}]
  %s7 = inlined_call_operand.vmem [shape: f32[1,16], index: 7, kind: input, shape index: {}]
  %s8 = inlined_call_operand.<no memory space> [shape: f32[1,1], index: 8, kind: input, shape index: {}]
  %s9 = inlined_call_operand.hbm [shape: f32[1,512], index: 9, kind: output, shape index: {}]
  %s10 = sld [smem:[#allocation0]]
  $region46: #{tpu_custom_call.1} parent=0
    _
  %s12 = ssub.s32 1, %s10
  %s13 = scalar_select 0, %s12, %s10
  %v14 = vstv %s8
  %15 = vst [vmem:[#allocation2] sm:$0x1] %v14
  $region1: #{tpu_custom_call.1} parent=0
    #allocation3 [shape = 'u8[2048]{0}', space=vmem, size = 0x800, scoped, tag = 'output window, operand 0, single buffered']
    #allocation4 [shape = 's32[1]{0}', space=sflag, size = 0x4, scoped, tag = 'scoped memory for tpu_custom_call.1']
    %16 = vsyncpa [#allocation4], 0
    // Predicated region
    $region2: #{tpu_custom_call.1} parent=1 // pred_check
      _
    $region3: #{tpu_custom_call.1} parent=1 // pred_check_branch
      %18 = sbr.rel (0) target = $region5
    $region4: #{tpu_custom_call.1} parent=1 // pred_region
      _
    $region5: #{tpu_custom_call.1} parent=1 // pred_fallthru
      _
    // Predicated region
    $region6: #{tpu_custom_call.1} parent=1 // pred_check
      _
    $region7: #{tpu_custom_call.1} parent=1 // pred_check_branch
      %20 = sbr.rel (0) target = $region9
    $region8: #{tpu_custom_call.1} parent=1 // pred_region
      _
    $region9: #{tpu_custom_call.1} parent=1 // pred_fallthru
      _
    // Predicated region
    $region10: #{tpu_custom_call.1} parent=1 // pred_check
      _
    $region11: #{tpu_custom_call.1} parent=1 // pred_check_branch
      %22 = sbr.rel (0) target = $region13
    $region12: #{tpu_custom_call.1} parent=1 // pred_region
      _
    $region13: #{tpu_custom_call.1} parent=1 // pred_fallthru
      _
    // Predicated region
    $region14: #{tpu_custom_call.1} parent=1 // pred_check
      _
    $region15: #{tpu_custom_call.1} parent=1 // pred_check_branch
      %24 = sbr.rel (0) target = $region17
    $region16: #{tpu_custom_call.1} parent=1 // pred_region
      _
    $region17: #{tpu_custom_call.1} parent=1 // pred_fallthru
      _
    // Predicated region
    $region18: #{tpu_custom_call.1} parent=1 // pred_check
      _
    $region19: #{tpu_custom_call.1} parent=1 // pred_check_branch
      %26 = sbr.rel (0) target = $region21
    $region20: #{tpu_custom_call.1} parent=1 // pred_region
      _
    $region21: #{tpu_custom_call.1} parent=1 // pred_fallthru
      _
    // Predicated region
    $region22: #{tpu_custom_call.1} parent=1 // pred_check
      _
    $region23: #{tpu_custom_call.1} parent=1 // pred_check_branch
      %28 = sbr.rel (0) target = $region25
    $region24: #{tpu_custom_call.1} parent=1 // pred_region
      _
    $region25: #{tpu_custom_call.1} parent=1 // pred_fallthru
      _
    // Predicated region
    $region26: #{tpu_custom_call.1} parent=1 // pred_check
      _
    $region27: #{tpu_custom_call.1} parent=1 // pred_check_branch
      %30 = sbr.rel (0) target = $region29
    $region28: #{tpu_custom_call.1} parent=1 // pred_region
      _
    $region29: #{tpu_custom_call.1} parent=1 // pred_fallthru
      _
    // Predicated region
    $region30: #{tpu_custom_call.1} parent=1 // pred_check
      _
    $region31: #{tpu_custom_call.1} parent=1 // pred_check_branch
      %32 = sbr.rel (0) target = $region33
    $region32: #{tpu_custom_call.1} parent=1 // pred_region
      _
    $region33: #{tpu_custom_call.1} parent=1 // pred_fallthru
      _
    // Predicated region
    $region34: #{tpu_custom_call.1} parent=1 // pred_check
      _
    $region35: #{tpu_custom_call.1} parent=1 // pred_check_branch
      %34 = sbr.rel (0) target = $region37
    $region36: #{tpu_custom_call.1} parent=1 // pred_region
      _
    $region37: #{tpu_custom_call.1} parent=1 // pred_fallthru
      _
    %v35 = vld [vmem:[%s0] sm:$0xff]
    %v36 = vld [vmem:[%s0 + $0x8] sm:$0xff]
    %v37 = vld [vmem:[%s0 + $0x10] sm:$0xff]
    %v38 = vld [vmem:[%s0 + $0x18] sm:$0xff]
    %v39 = vld [vmem:[%s0 + $0x20] sm:$0xff]
    %v40 = vld [vmem:[%s0 + $0x28] sm:$0xff]
    %v41 = vld [vmem:[%s0 + $0x30] sm:$0xff]
    %v42 = vld [vmem:[%s0 + $0x38] sm:$0xff]
    %v43 = vld [vmem:[%s0 + $0x40] sm:$0xff]
    %v44 = vld [vmem:[%s0 + $0x48] sm:$0xff]
    %v45 = vld [vmem:[%s0 + $0x50] sm:$0xff]
    %v46 = vld [vmem:[%s0 + $0x58] sm:$0xff]
    %v47 = vld [vmem:[%s0 + $0x60] sm:$0xff]
    %v48 = vld [vmem:[%s0 + $0x68] sm:$0xff]
    %v49 = vld [vmem:[%s0 + $0x70] sm:$0xff]
    %v50 = vld [vmem:[%s0 + $0x78] sm:$0xff]
    %v51 = vld [vmem:[%s0 + $0x80] sm:$0xff]
    %v52 = vld [vmem:[%s0 + $0x88] sm:$0xff]
    %v53 = vld [vmem:[%s0 + $0x90] sm:$0xff]
    %v54 = vld [vmem:[%s0 + $0x98] sm:$0xff]
    %v55 = vld [vmem:[%s0 + $0xa0] sm:$0xff]
    %v56 = vld [vmem:[%s0 + $0xa8] sm:$0xff]
    %v57 = vld [vmem:[%s0 + $0xb0] sm:$0xff]
    %v58 = vld [vmem:[%s0 + $0xb8] sm:$0xff]
    %v59 = vld [vmem:[%s0 + $0xc0] sm:$0xff]
    %v60 = vld [vmem:[%s0 + $0xc8] sm:$0xff]
    %v61 = vld [vmem:[%s0 + $0xd0] sm:$0xff]
    %v62 = vld [vmem:[%s0 + $0xd8] sm:$0xff]
    %v63 = vld [vmem:[%s0 + $0xe0] sm:$0xff]
    %v64 = vld [vmem:[%s0 + $0xe8] sm:$0xff]
    %v65 = vld [vmem:[%s0 + $0xf0] sm:$0xff]
    %v66 = vld [vmem:[%s0 + $0xf8] sm:$0xff]
    %v67 = vld [vmem:[%s0 + $0x100] sm:$0xff]
    %v68 = vld [vmem:[%s0 + $0x108] sm:$0xff]
    %v69 = vld [vmem:[%s0 + $0x110] sm:$0xff]
    %v70 = vld [vmem:[%s0 + $0x118] sm:$0xff]
    %v71 = vld [vmem:[%s0 + $0x120] sm:$0xff]
    %v72 = vld [vmem:[%s0 + $0x128] sm:$0xff]
    %v73 = vld [vmem:[%s0 + $0x130] sm:$0xff]
    %v74 = vld [vmem:[%s0 + $0x138] sm:$0xff]
    %v75 = vld [vmem:[%s0 + $0x140] sm:$0xff]
    %v76 = vld [vmem:[%s0 + $0x148] sm:$0xff]
    %v77 = vld [vmem:[%s0 + $0x150] sm:$0xff]
    %v78 = vld [vmem:[%s0 + $0x158] sm:$0xff]
    %v79 = vld [vmem:[%s0 + $0x160] sm:$0xff]
    %v80 = vld [vmem:[%s0 + $0x168] sm:$0xff]
    %v81 = vld [vmem:[%s0 + $0x170] sm:$0xff]
    %v82 = vld [vmem:[%s0 + $0x178] sm:$0xff]
    %v83 = vld [vmem:[%s0 + $0x180] sm:$0xff]
    %v84 = vld [vmem:[%s0 + $0x188] sm:$0xff]
    %v85 = vld [vmem:[%s0 + $0x190] sm:$0xff]
    %v86 = vld [vmem:[%s0 + $0x198] sm:$0xff]
    %v87 = vld [vmem:[%s0 + $0x1a0] sm:$0xff]
    %v88 = vld [vmem:[%s0 + $0x1a8] sm:$0xff]
    %v89 = vld [vmem:[%s0 + $0x1b0] sm:$0xff]
    %v90 = vld [vmem:[%s0 + $0x1b8] sm:$0xff]
    %v91 = vld [vmem:[%s0 + $0x1c0] sm:$0xff]
    %v92 = vld [vmem:[%s0 + $0x1c8] sm:$0xff]
    %v93 = vld [vmem:[%s0 + $0x1d0] sm:$0xff]
    %v94 = vld [vmem:[%s0 + $0x1d8] sm:$0xff]
    %v95 = vld [vmem:[%s0 + $0x1e0] sm:$0xff]
    %v96 = vld [vmem:[%s0 + $0x1e8] sm:$0xff]
    %v97 = vld [vmem:[%s0 + $0x1f0] sm:$0xff]
    %v98 = vld [vmem:[%s0 + $0x1f8] sm:$0xff]
    %v99 = vld [vmem:[%s1] sm:$0xff]
    %v100 = vld [vmem:[%s1 + $0x8] sm:$0xff]
    %v101 = vld [vmem:[%s1 + $0x10] sm:$0xff]
    %v102 = vld [vmem:[%s1 + $0x18] sm:$0xff]
    %v103 = vld [vmem:[%s1 + $0x20] sm:$0xff]
    %v104 = vld [vmem:[%s1 + $0x28] sm:$0xff]
    %v105 = vld [vmem:[%s1 + $0x30] sm:$0xff]
    %v106 = vld [vmem:[%s1 + $0x38] sm:$0xff]
    %v107 = vld [vmem:[%s2] sm:$0xff]
    %v108 = vld [vmem:[%s2 + $0x8] sm:$0xff]
    %v109 = vld [vmem:[%s2 + $0x10] sm:$0xff]
    %v110 = vld [vmem:[%s2 + $0x18] sm:$0xff]
    %v111 = vld [vmem:[%s2 + $0x20] sm:$0xff]
    %v112 = vld [vmem:[%s2 + $0x28] sm:$0xff]
    %v113 = vld [vmem:[%s2 + $0x30] sm:$0xff]
    %v114 = vld [vmem:[%s2 + $0x38] sm:$0xff]
    %116 = vset.pattern.permute.xlu0 0
    %117 = vperm.xlu0 %116, %v107
    %v118 = vpop.permute.xlu0 %117
    %121 = vset.pattern.permute.xlu0 0
    %122 = vperm.xlu0 %121, %v108
    %v123 = vpop.permute.xlu0 %122
    %126 = vset.pattern.permute.xlu0 0
    %127 = vperm.xlu0 %126, %v109
    %v128 = vpop.permute.xlu0 %127
    %131 = vset.pattern.permute.xlu0 0
    %132 = vperm.xlu0 %131, %v110
    %v133 = vpop.permute.xlu0 %132
    %136 = vset.pattern.permute.xlu0 0
    %137 = vperm.xlu0 %136, %v111
    %v138 = vpop.permute.xlu0 %137
    %141 = vset.pattern.permute.xlu0 0
    %142 = vperm.xlu0 %141, %v112
    %v143 = vpop.permute.xlu0 %142
    %146 = vset.pattern.permute.xlu0 0
    %147 = vperm.xlu0 %146, %v113
    %v148 = vpop.permute.xlu0 %147
    %151 = vset.pattern.permute.xlu0 0
    %152 = vperm.xlu0 %151, %v114
    %v153 = vpop.permute.xlu0 %152
    %vm155 = vcmask 31744
    %v157 = vsel %vm155, %v99, 0
    %v160 = vsel %vm155, %v100, 0
    %v163 = vsel %vm155, %v101, 0
    %v166 = vsel %vm155, %v102, 0
    %v169 = vsel %vm155, %v103, 0
    %v172 = vsel %vm155, %v104, 0
    %v175 = vsel %vm155, %v105, 0
    %v178 = vsel %vm155, %v106, 0
    %v181 = vsel %vm155, %v35, 0
    %v184 = vsel %vm155, %v36, 0
    %v187 = vsel %vm155, %v37, 0
    %v190 = vsel %vm155, %v38, 0
    %v193 = vsel %vm155, %v39, 0
    %v196 = vsel %vm155, %v40, 0
    %v199 = vsel %vm155, %v41, 0
    %v202 = vsel %vm155, %v42, 0
    %v205 = vsel %vm155, %v43, 0
    %v208 = vsel %vm155, %v44, 0
    %v211 = vsel %vm155, %v45, 0
    %v214 = vsel %vm155, %v46, 0
    %v217 = vsel %vm155, %v47, 0
    %v220 = vsel %vm155, %v48, 0
    %v223 = vsel %vm155, %v49, 0
    %v226 = vsel %vm155, %v50, 0
    %v229 = vsel %vm155, %v51, 0
    %v232 = vsel %vm155, %v52, 0
    %v235 = vsel %vm155, %v53, 0
    %v238 = vsel %vm155, %v54, 0
    %v241 = vsel %vm155, %v55, 0
    %v244 = vsel %vm155, %v56, 0
    %v247 = vsel %vm155, %v57, 0
    %v250 = vsel %vm155, %v58, 0
    %v253 = vsel %vm155, %v59, 0
    %v256 = vsel %vm155, %v60, 0
    %v259 = vsel %vm155, %v61, 0
    %v262 = vsel %vm155, %v62, 0
    %v265 = vsel %vm155, %v63, 0
    %v268 = vsel %vm155, %v64, 0
    %v271 = vsel %vm155, %v65, 0
    %v274 = vsel %vm155, %v66, 0
    %v277 = vsel %vm155, %v67, 0
    %v280 = vsel %vm155, %v68, 0
    %v283 = vsel %vm155, %v69, 0
    %v286 = vsel %vm155, %v70, 0
    %v289 = vsel %vm155, %v71, 0
    %v292 = vsel %vm155, %v72, 0
    %v295 = vsel %vm155, %v73, 0
    %v298 = vsel %vm155, %v74, 0
    %v301 = vsel %vm155, %v75, 0
    %v304 = vsel %vm155, %v76, 0
    %v307 = vsel %vm155, %v77, 0
    %v310 = vsel %vm155, %v78, 0
    %v313 = vsel %vm155, %v79, 0
    %v316 = vsel %vm155, %v80, 0
    %v319 = vsel %vm155, %v81, 0
    %v322 = vsel %vm155, %v82, 0
    %v325 = vsel %vm155, %v83, 0
    %v328 = vsel %vm155, %v84, 0
    %v331 = vsel %vm155, %v85, 0
    %v334 = vsel %vm155, %v86, 0
    %v337 = vsel %vm155, %v87, 0
    %v340 = vsel %vm155, %v88, 0
    %v343 = vsel %vm155, %v89, 0
    %v346 = vsel %vm155, %v90, 0
    %v349 = vsel %vm155, %v91, 0
    %v352 = vsel %vm155, %v92, 0
    %v355 = vsel %vm155, %v93, 0
    %v358 = vsel %vm155, %v94, 0
    %v361 = vsel %vm155, %v95, 0
    %v364 = vsel %vm155, %v96, 0
    %v367 = vsel %vm155, %v97, 0
    %v370 = vsel %vm155, %v98, 0
    %372 = vmatpush.xpose.msra.mxu0 %v226
    %373 = vmatpush.xpose.msra.mxu0 %v223
    %374 = vmatpush.xpose.msra.mxu0 %v220
    %375 = vmatpush.xpose.msra.mxu0 %v217
    %376 = vmatpush.xpose.msra.mxu0 %v214
    %377 = vmatpush.xpose.msra.mxu0 %v211
    %378 = vmatpush.xpose.msra.mxu0 %v208
    %379 = vmatpush.xpose.msra.mxu0 %v205
    %380 = vmatpush.xpose.msra.mxu0 %v202
    %381 = vmatpush.xpose.msra.mxu0 %v199
    %382 = vmatpush.xpose.msra.mxu0 %v196
    %383 = vmatpush.xpose.msra.mxu0 %v193
    %384 = vmatpush.xpose.msra.mxu0 %v190
    %385 = vmatpush.xpose.msra.mxu0 %v187
    %386 = vmatpush.xpose.msra.mxu0 %v184
    %387 = vmatpush.xpose.msra.mxu0 %v181
    %388 = vmatmul.f32.gmra.mxu0 %v157
    %v389 = vpop.f32.mrf.mxu0
    %v390 = vadd.f32 %v118, %v389
    %391 = vmatmul.f32.gmra.mxu0 %v160
    %v392 = vpop.f32.mrf.mxu0
    %v393 = vadd.f32 %v123, %v392
    %394 = vmatmul.f32.gmra.mxu0 %v163
    %v395 = vpop.f32.mrf.mxu0
    %v396 = vadd.f32 %v128, %v395
    %397 = vmatmul.f32.gmra.mxu0 %v166
    %v398 = vpop.f32.mrf.mxu0
    %v399 = vadd.f32 %v133, %v398
    %400 = vmatmul.f32.gmra.mxu0 %v169
    %v401 = vpop.f32.mrf.mxu0
    %v402 = vadd.f32 %v138, %v401
    %403 = vmatmul.f32.gmra.mxu0 %v172
    %v404 = vpop.f32.mrf.mxu0
    %v405 = vadd.f32 %v143, %v404
    %406 = vmatmul.f32.gmra.mxu0 %v175
    %v407 = vpop.f32.mrf.mxu0
    %v408 = vadd.f32 %v148, %v407
    %409 = vmatmul.f32.gmra.mxu0 %v178
    %v410 = vpop.f32.mrf.mxu0
    %v411 = vadd.f32 %v153, %v410
    %412 = vdwg.mxu0
    %413 = vmatpush.xpose.msra.mxu0 %v274
    %414 = vmatpush.xpose.msra.mxu0 %v271
    %415 = vmatpush.xpose.msra.mxu0 %v268
    %416 = vmatpush.xpose.msra.mxu0 %v265
    %417 = vmatpush.xpose.msra.mxu0 %v262
    %418 = vmatpush.xpose.msra.mxu0 %v259
    %419 = vmatpush.xpose.msra.mxu0 %v256
    %420 = vmatpush.xpose.msra.mxu0 %v253
    %421 = vmatpush.xpose.msra.mxu0 %v250
    %422 = vmatpush.xpose.msra.mxu0 %v247
    %423 = vmatpush.xpose.msra.mxu0 %v244
    %424 = vmatpush.xpose.msra.mxu0 %v241
    %425 = vmatpush.xpose.msra.mxu0 %v238
    %426 = vmatpush.xpose.msra.mxu0 %v235
    %427 = vmatpush.xpose.msra.mxu0 %v232
    %428 = vmatpush.xpose.msra.mxu0 %v229
    %429 = vmatmul.f32.gmra.mxu0 %v157
    %v430 = vpop.f32.mrf.mxu0
    %v431 = vadd.f32 %v118, %v430
    %432 = vmatmul.f32.gmra.mxu0 %v160
    %v433 = vpop.f32.mrf.mxu0
    %v434 = vadd.f32 %v123, %v433
    %435 = vmatmul.f32.gmra.mxu0 %v163
    %v436 = vpop.f32.mrf.mxu0
    %v437 = vadd.f32 %v128, %v436
    %438 = vmatmul.f32.gmra.mxu0 %v166
    %v439 = vpop.f32.mrf.mxu0
    %v440 = vadd.f32 %v133, %v439
    %441 = vmatmul.f32.gmra.mxu0 %v169
    %v442 = vpop.f32.mrf.mxu0
    %v443 = vadd.f32 %v138, %v442
    %444 = vmatmul.f32.gmra.mxu0 %v172
    %v445 = vpop.f32.mrf.mxu0
    %v446 = vadd.f32 %v143, %v445
    %447 = vmatmul.f32.gmra.mxu0 %v175
    %v448 = vpop.f32.mrf.mxu0
    %v449 = vadd.f32 %v148, %v448
    %450 = vmatmul.f32.gmra.mxu0 %v178
    %v451 = vpop.f32.mrf.mxu0
    %v452 = vadd.f32 %v153, %v451
    %453 = vdwg.mxu0
    %454 = vmatpush.xpose.msra.mxu0 %v322
    %455 = vmatpush.xpose.msra.mxu0 %v319
    %456 = vmatpush.xpose.msra.mxu0 %v316
    %457 = vmatpush.xpose.msra.mxu0 %v313
    %458 = vmatpush.xpose.msra.mxu0 %v310
    %459 = vmatpush.xpose.msra.mxu0 %v307
    %460 = vmatpush.xpose.msra.mxu0 %v304
    %461 = vmatpush.xpose.msra.mxu0 %v301
    %462 = vmatpush.xpose.msra.mxu0 %v298
    %463 = vmatpush.xpose.msra.mxu0 %v295
    %464 = vmatpush.xpose.msra.mxu0 %v292
    %465 = vmatpush.xpose.msra.mxu0 %v289
    %466 = vmatpush.xpose.msra.mxu0 %v286
    %467 = vmatpush.xpose.msra.mxu0 %v283
    %468 = vmatpush.xpose.msra.mxu0 %v280
    %469 = vmatpush.xpose.msra.mxu0 %v277
    %470 = vmatmul.f32.gmra.mxu0 %v157
    %v471 = vpop.f32.mrf.mxu0
    %v472 = vadd.f32 %v118, %v471
    %473 = vmatmul.f32.gmra.mxu0 %v160
    %v474 = vpop.f32.mrf.mxu0
    %v475 = vadd.f32 %v123, %v474
    %476 = vmatmul.f32.gmra.mxu0 %v163
    %v477 = vpop.f32.mrf.mxu0
    %v478 = vadd.f32 %v128, %v477
    %479 = vmatmul.f32.gmra.mxu0 %v166
    %v480 = vpop.f32.mrf.mxu0
    %v481 = vadd.f32 %v133, %v480
    %482 = vmatmul.f32.gmra.mxu0 %v169
    %v483 = vpop.f32.mrf.mxu0
    %v484 = vadd.f32 %v138, %v483
    %485 = vmatmul.f32.gmra.mxu0 %v172
    %v486 = vpop.f32.mrf.mxu0
    %v487 = vadd.f32 %v143, %v486
    %488 = vmatmul.f32.gmra.mxu0 %v175
    %v489 = vpop.f32.mrf.mxu0
    %v490 = vadd.f32 %v148, %v489
    %491 = vmatmul.f32.gmra.mxu0 %v178
    %v492 = vpop.f32.mrf.mxu0
    %v493 = vadd.f32 %v153, %v492
    %494 = vdwg.mxu0
    %495 = vmatpush.xpose.msra.mxu0 %v370
    %496 = vmatpush.xpose.msra.mxu0 %v367
    %497 = vmatpush.xpose.msra.mxu0 %v364
    %498 = vmatpush.xpose.msra.mxu0 %v361
    %499 = vmatpush.xpose.msra.mxu0 %v358
    %500 = vmatpush.xpose.msra.mxu0 %v355
    %501 = vmatpush.xpose.msra.mxu0 %v352
    %502 = vmatpush.xpose.msra.mxu0 %v349
    %503 = vmatpush.xpose.msra.mxu0 %v346
    %504 = vmatpush.xpose.msra.mxu0 %v343
    %505 = vmatpush.xpose.msra.mxu0 %v340
    %506 = vmatpush.xpose.msra.mxu0 %v337
    %507 = vmatpush.xpose.msra.mxu0 %v334
    %508 = vmatpush.xpose.msra.mxu0 %v331
    %509 = vmatpush.xpose.msra.mxu0 %v328
    %510 = vmatpush.xpose.msra.mxu0 %v325
    %511 = vmatmul.f32.gmra.mxu0 %v157
    %v512 = vpop.f32.mrf.mxu0
    %v513 = vadd.f32 %v118, %v512
    %514 = vmatmul.f32.gmra.mxu0 %v160
    %v515 = vpop.f32.mrf.mxu0
    %v516 = vadd.f32 %v123, %v515
    %517 = vmatmul.f32.gmra.mxu0 %v163
    %v518 = vpop.f32.mrf.mxu0
    %v519 = vadd.f32 %v128, %v518
    %520 = vmatmul.f32.gmra.mxu0 %v166
    %v521 = vpop.f32.mrf.mxu0
    %v522 = vadd.f32 %v133, %v521
    %523 = vmatmul.f32.gmra.mxu0 %v169
    %v524 = vpop.f32.mrf.mxu0
    %v525 = vadd.f32 %v138, %v524
    %526 = vmatmul.f32.gmra.mxu0 %v172
    %v527 = vpop.f32.mrf.mxu0
    %v528 = vadd.f32 %v143, %v527
    %529 = vmatmul.f32.gmra.mxu0 %v175
    %v530 = vpop.f32.mrf.mxu0
    %v531 = vadd.f32 %v148, %v530
    %532 = vmatmul.f32.gmra.mxu0 %v178
    %v533 = vpop.f32.mrf.mxu0
    %v534 = vadd.f32 %v153, %v533
    %535 = vdwg.mxu0
    %v536 = vmax.f32 %v390, 0.0
    %v537 = vmax.f32 %v431, 0.0
    %v538 = vmax.f32 %v472, 0.0
    %v539 = vmax.f32 %v513, 0.0
    %v540 = vmax.f32 %v393, 0.0
    %v541 = vmax.f32 %v434, 0.0
    %v542 = vmax.f32 %v475, 0.0
    %v543 = vmax.f32 %v516, 0.0
    %v544 = vmax.f32 %v396, 0.0
    %v545 = vmax.f32 %v437, 0.0
    %v546 = vmax.f32 %v478, 0.0
    %v547 = vmax.f32 %v519, 0.0
    %v548 = vmax.f32 %v399, 0.0
    %v549 = vmax.f32 %v440, 0.0
    %v550 = vmax.f32 %v481, 0.0
    %v551 = vmax.f32 %v522, 0.0
    %v552 = vmax.f32 %v402, 0.0
    %v553 = vmax.f32 %v443, 0.0
    %v554 = vmax.f32 %v484, 0.0
    %v555 = vmax.f32 %v525, 0.0
    %v556 = vmax.f32 %v405, 0.0
    %v557 = vmax.f32 %v446, 0.0
    %v558 = vmax.f32 %v487, 0.0
    %v559 = vmax.f32 %v528, 0.0
    %v560 = vmax.f32 %v408, 0.0
    %v561 = vmax.f32 %v449, 0.0
    %v562 = vmax.f32 %v490, 0.0
    %v563 = vmax.f32 %v531, 0.0
    %v564 = vmax.f32 %v411, 0.0
    %v565 = vmax.f32 %v452, 0.0
    %v566 = vmax.f32 %v493, 0.0
    %v567 = vmax.f32 %v534, 0.0
    %v568 = vld [vmem:[%s3] sm:$0xff]
    %v569 = vld [vmem:[%s3 + $0x8] sm:$0xff]
    %v570 = vld [vmem:[%s3 + $0x10] sm:$0xff]
    %v571 = vld [vmem:[%s3 + $0x18] sm:$0xff]
    %v572 = vld [vmem:[%s4] sm:$0xff]
    %v573 = vld [vmem:[%s4 + $0x8] sm:$0xff]
    %v574 = vld [vmem:[%s4 + $0x10] sm:$0xff]
    %v575 = vld [vmem:[%s4 + $0x18] sm:$0xff]
    %577 = vset.pattern.permute.xlu0 0
    %578 = vperm.xlu0 %577, %v572
    %v579 = vpop.permute.xlu0 %578
    %582 = vset.pattern.permute.xlu0 0
    %583 = vperm.xlu0 %582, %v573
    %v584 = vpop.permute.xlu0 %583
    %587 = vset.pattern.permute.xlu0 0
    %588 = vperm.xlu0 %587, %v574
    %v589 = vpop.permute.xlu0 %588
    %592 = vset.pattern.permute.xlu0 0
    %593 = vperm.xlu0 %592, %v575
    %v594 = vpop.permute.xlu0 %593
    %vm596 = vcmask 523264
    %v598 = vsel %vm596, %v568, 0
    %v601 = vsel %vm596, %v569, 0
    %v604 = vsel %vm596, %v570, 0
    %v607 = vsel %vm596, %v571, 0
    %609 = vmatpush.msra.mxu0 0.0
    %610 = vmatpush.msra.mxu0 0.0
    %611 = vmatpush.msra.mxu0 0.0
    %612 = vmatpush.msra.mxu0 0.0
    %613 = vmatpush.msra.mxu0 0.0
    %614 = vmatpush.msra.mxu0 0.0
    %615 = vmatpush.msra.mxu0 0.0
    %616 = vmatpush.msra.mxu0 0.0
    %617 = vmatpush.msra.mxu0 %v564
    %618 = vmatpush.msra.mxu0 %v560
    %619 = vmatpush.msra.mxu0 %v556
    %620 = vmatpush.msra.mxu0 %v552
    %621 = vmatpush.msra.mxu0 %v548
    %622 = vmatpush.msra.mxu0 %v544
    %623 = vmatpush.msra.mxu0 %v540
    %624 = vmatpush.msra.mxu0 %v536
    %625 = vmatmul.f32.gmra.mxu0 %v598
    %v626 = vpop.f32.mrf.mxu0
    %v627 = vadd.f32 %v579, %v626
    %628 = vmatmul.f32.gmra.mxu0 %v601
    %v629 = vpop.f32.mrf.mxu0
    %v630 = vadd.f32 %v584, %v629
    %631 = vmatmul.f32.gmra.mxu0 %v604
    %v632 = vpop.f32.mrf.mxu0
    %v633 = vadd.f32 %v589, %v632
    %634 = vmatmul.f32.gmra.mxu0 %v607
    %v635 = vpop.f32.mrf.mxu0
    %v636 = vadd.f32 %v594, %v635
    %637 = vdwg.mxu0
    %638 = vmatpush.msra.mxu0 0.0
    %639 = vmatpush.msra.mxu0 0.0
    %640 = vmatpush.msra.mxu0 0.0
    %641 = vmatpush.msra.mxu0 0.0
    %642 = vmatpush.msra.mxu0 0.0
    %643 = vmatpush.msra.mxu0 0.0
    %644 = vmatpush.msra.mxu0 0.0
    %645 = vmatpush.msra.mxu0 0.0
    %646 = vmatpush.msra.mxu0 %v565
    %647 = vmatpush.msra.mxu0 %v561
    %648 = vmatpush.msra.mxu0 %v557
    %649 = vmatpush.msra.mxu0 %v553
    %650 = vmatpush.msra.mxu0 %v549
    %651 = vmatpush.msra.mxu0 %v545
    %652 = vmatpush.msra.mxu0 %v541
    %653 = vmatpush.msra.mxu0 %v537
    %654 = vmatmul.f32.gmra.mxu0 %v598
    %v655 = vpop.f32.mrf.mxu0
    %v656 = vadd.f32 %v579, %v655
    %657 = vmatmul.f32.gmra.mxu0 %v601
    %v658 = vpop.f32.mrf.mxu0
    %v659 = vadd.f32 %v584, %v658
    %660 = vmatmul.f32.gmra.mxu0 %v604
    %v661 = vpop.f32.mrf.mxu0
    %v662 = vadd.f32 %v589, %v661
    %663 = vmatmul.f32.gmra.mxu0 %v607
    %v664 = vpop.f32.mrf.mxu0
    %v665 = vadd.f32 %v594, %v664
    %666 = vdwg.mxu0
    %667 = vmatpush.msra.mxu0 0.0
    %668 = vmatpush.msra.mxu0 0.0
    %669 = vmatpush.msra.mxu0 0.0
    %670 = vmatpush.msra.mxu0 0.0
    %671 = vmatpush.msra.mxu0 0.0
    %672 = vmatpush.msra.mxu0 0.0
    %673 = vmatpush.msra.mxu0 0.0
    %674 = vmatpush.msra.mxu0 0.0
    %675 = vmatpush.msra.mxu0 %v566
    %676 = vmatpush.msra.mxu0 %v562
    %677 = vmatpush.msra.mxu0 %v558
    %678 = vmatpush.msra.mxu0 %v554
    %679 = vmatpush.msra.mxu0 %v550
    %680 = vmatpush.msra.mxu0 %v546
    %681 = vmatpush.msra.mxu0 %v542
    %682 = vmatpush.msra.mxu0 %v538
    %683 = vmatmul.f32.gmra.mxu0 %v598
    %v684 = vpop.f32.mrf.mxu0
    %v685 = vadd.f32 %v579, %v684
    %686 = vmatmul.f32.gmra.mxu0 %v601
    %v687 = vpop.f32.mrf.mxu0
    %v688 = vadd.f32 %v584, %v687
    %689 = vmatmul.f32.gmra.mxu0 %v604
    %v690 = vpop.f32.mrf.mxu0
    %v691 = vadd.f32 %v589, %v690
    %692 = vmatmul.f32.gmra.mxu0 %v607
    %v693 = vpop.f32.mrf.mxu0
    %v694 = vadd.f32 %v594, %v693
    %695 = vdwg.mxu0
    %696 = vmatpush.msra.mxu0 0.0
    %697 = vmatpush.msra.mxu0 0.0
    %698 = vmatpush.msra.mxu0 0.0
    %699 = vmatpush.msra.mxu0 0.0
    %700 = vmatpush.msra.mxu0 0.0
    %701 = vmatpush.msra.mxu0 0.0
    %702 = vmatpush.msra.mxu0 0.0
    %703 = vmatpush.msra.mxu0 0.0
    %704 = vmatpush.msra.mxu0 %v567
    %705 = vmatpush.msra.mxu0 %v563
    %706 = vmatpush.msra.mxu0 %v559
    %707 = vmatpush.msra.mxu0 %v555
    %708 = vmatpush.msra.mxu0 %v551
    %709 = vmatpush.msra.mxu0 %v547
    %710 = vmatpush.msra.mxu0 %v543
    %711 = vmatpush.msra.mxu0 %v539
    %712 = vmatmul.f32.gmra.mxu0 %v598
    %v713 = vpop.f32.mrf.mxu0
    %v714 = vadd.f32 %v579, %v713
    %715 = vmatmul.f32.gmra.mxu0 %v601
    %v716 = vpop.f32.mrf.mxu0
    %v717 = vadd.f32 %v584, %v716
    %718 = vmatmul.f32.gmra.mxu0 %v604
    %v719 = vpop.f32.mrf.mxu0
    %v720 = vadd.f32 %v589, %v719
    %721 = vmatmul.f32.gmra.mxu0 %v607
    %v722 = vpop.f32.mrf.mxu0
    %v723 = vadd.f32 %v594, %v722
    %724 = vdwg.mxu0
    %v725 = vmax.f32 %v627, 0.0
    %v726 = vmax.f32 %v656, 0.0
    %v727 = vmax.f32 %v685, 0.0
    %v728 = vmax.f32 %v714, 0.0
    %v729 = vmax.f32 %v630, 0.0
    %v730 = vmax.f32 %v659, 0.0
    %v731 = vmax.f32 %v688, 0.0
    %v732 = vmax.f32 %v717, 0.0
    %v733 = vmax.f32 %v633, 0.0
    %v734 = vmax.f32 %v662, 0.0
    %v735 = vmax.f32 %v691, 0.0
    %v736 = vmax.f32 %v720, 0.0
    %v737 = vmax.f32 %v636, 0.0
    %v738 = vmax.f32 %v665, 0.0
    %v739 = vmax.f32 %v694, 0.0
    %v740 = vmax.f32 %v723, 0.0
    %v741 = vld [vmem:[%s5] sm:$0xff]
    %v742 = vld [vmem:[%s5 + $0x8] sm:$0xff]
    %v743 = vld [vmem:[%s6] sm:$0xff]
    %v744 = vld [vmem:[%s6 + $0x8] sm:$0xff]
    %746 = vset.pattern.permute.xlu0 0
    %747 = vperm.xlu0 %746, %v743
    %v748 = vpop.permute.xlu0 %747
    %751 = vset.pattern.permute.xlu0 0
    %752 = vperm.xlu0 %751, %v744
    %v753 = vpop.permute.xlu0 %752
    %vm755 = vcmask 261120
    %v757 = vsel %vm755, %v741, 0
    %v760 = vsel %vm755, %v742, 0
    %762 = vmatpush.msra.mxu0 0.0
    %763 = vmatpush.msra.mxu0 0.0
    %764 = vmatpush.msra.mxu0 0.0
    %765 = vmatpush.msra.mxu0 0.0
    %766 = vmatpush.msra.mxu0 0.0
    %767 = vmatpush.msra.mxu0 0.0
    %768 = vmatpush.msra.mxu0 0.0
    %769 = vmatpush.msra.mxu0 0.0
    %770 = vmatpush.msra.mxu0 0.0
    %771 = vmatpush.msra.mxu0 0.0
    %772 = vmatpush.msra.mxu0 0.0
    %773 = vmatpush.msra.mxu0 0.0
    %774 = vmatpush.msra.mxu0 %v737
    %775 = vmatpush.msra.mxu0 %v733
    %776 = vmatpush.msra.mxu0 %v729
    %777 = vmatpush.msra.mxu0 %v725
    %778 = vmatmul.f32.gmra.mxu0 %v757
    %v779 = vpop.f32.mrf.mxu0
    %v780 = vadd.f32 %v748, %v779
    %781 = vmatmul.f32.gmra.mxu0 %v760
    %v782 = vpop.f32.mrf.mxu0
    %v783 = vadd.f32 %v753, %v782
    %784 = vdwg.mxu0
    %785 = vmatpush.msra.mxu0 0.0
    %786 = vmatpush.msra.mxu0 0.0
    %787 = vmatpush.msra.mxu0 0.0
    %788 = vmatpush.msra.mxu0 0.0
    %789 = vmatpush.msra.mxu0 0.0
    %790 = vmatpush.msra.mxu0 0.0
    %791 = vmatpush.msra.mxu0 0.0
    %792 = vmatpush.msra.mxu0 0.0
    %793 = vmatpush.msra.mxu0 0.0
    %794 = vmatpush.msra.mxu0 0.0
    %795 = vmatpush.msra.mxu0 0.0
    %796 = vmatpush.msra.mxu0 0.0
    %797 = vmatpush.msra.mxu0 %v738
    %798 = vmatpush.msra.mxu0 %v734
    %799 = vmatpush.msra.mxu0 %v730
    %800 = vmatpush.msra.mxu0 %v726
    %801 = vmatmul.f32.gmra.mxu0 %v757
    %v802 = vpop.f32.mrf.mxu0
    %v803 = vadd.f32 %v748, %v802
    %804 = vmatmul.f32.gmra.mxu0 %v760
    %v805 = vpop.f32.mrf.mxu0
    %v806 = vadd.f32 %v753, %v805
    %807 = vdwg.mxu0
    %808 = vmatpush.msra.mxu0 0.0
    %809 = vmatpush.msra.mxu0 0.0
    %810 = vmatpush.msra.mxu0 0.0
    %811 = vmatpush.msra.mxu0 0.0
    %812 = vmatpush.msra.mxu0 0.0
    %813 = vmatpush.msra.mxu0 0.0
    %814 = vmatpush.msra.mxu0 0.0
    %815 = vmatpush.msra.mxu0 0.0
    %816 = vmatpush.msra.mxu0 0.0
    %817 = vmatpush.msra.mxu0 0.0
    %818 = vmatpush.msra.mxu0 0.0
    %819 = vmatpush.msra.mxu0 0.0
    %820 = vmatpush.msra.mxu0 %v739
    %821 = vmatpush.msra.mxu0 %v735
    %822 = vmatpush.msra.mxu0 %v731
    %823 = vmatpush.msra.mxu0 %v727
    %824 = vmatmul.f32.gmra.mxu0 %v757
    %v825 = vpop.f32.mrf.mxu0
    %v826 = vadd.f32 %v748, %v825
    %827 = vmatmul.f32.gmra.mxu0 %v760
    %v828 = vpop.f32.mrf.mxu0
    %v829 = vadd.f32 %v753, %v828
    %830 = vdwg.mxu0
    %831 = vmatpush.msra.mxu0 0.0
    %832 = vmatpush.msra.mxu0 0.0
    %833 = vmatpush.msra.mxu0 0.0
    %834 = vmatpush.msra.mxu0 0.0
    %835 = vmatpush.msra.mxu0 0.0
    %836 = vmatpush.msra.mxu0 0.0
    %837 = vmatpush.msra.mxu0 0.0
    %838 = vmatpush.msra.mxu0 0.0
    %839 = vmatpush.msra.mxu0 0.0
    %840 = vmatpush.msra.mxu0 0.0
    %841 = vmatpush.msra.mxu0 0.0
    %842 = vmatpush.msra.mxu0 0.0
    %843 = vmatpush.msra.mxu0 %v740
    %844 = vmatpush.msra.mxu0 %v736
    %845 = vmatpush.msra.mxu0 %v732
    %846 = vmatpush.msra.mxu0 %v728
    %847 = vmatmul.f32.gmra.mxu0 %v757
    %v848 = vpop.f32.mrf.mxu0
    %v849 = vadd.f32 %v748, %v848
    %850 = vmatmul.f32.gmra.mxu0 %v760
    %v851 = vpop.f32.mrf.mxu0
    %v852 = vadd.f32 %v753, %v851
    %853 = vdwg.mxu0
    %v854 = vmax.f32 %v780, 0.0
    %v855 = vmax.f32 %v803, 0.0
    %v856 = vmax.f32 %v826, 0.0
    %v857 = vmax.f32 %v849, 0.0
    %v858 = vmax.f32 %v783, 0.0
    %v859 = vmax.f32 %v806, 0.0
    %v860 = vmax.f32 %v829, 0.0
    %v861 = vmax.f32 %v852, 0.0
    %v862 = vld [vmem:[%s7] sm:$0x1]
    %v863 = vld [vmem:[#allocation2] sm:$0x1]
    %865 = vset.pattern.permute.xlu0 0
    %866 = vperm.xlu0 %865, %v863
    %v867 = vpop.permute.xlu0 %866
    %v869 = vperm.slane %v867, 0
    %vm870 = vcmask 130048
    %v872 = vsel %vm870, %v862, 0
    %874 = vmatpush.msra.mxu0 0.0
    %875 = vmatpush.msra.mxu0 0.0
    %876 = vmatpush.msra.mxu0 0.0
    %877 = vmatpush.msra.mxu0 0.0
    %878 = vmatpush.msra.mxu0 0.0
    %879 = vmatpush.msra.mxu0 0.0
    %880 = vmatpush.msra.mxu0 0.0
    %881 = vmatpush.msra.mxu0 0.0
    %882 = vmatpush.msra.mxu0 0.0
    %883 = vmatpush.msra.mxu0 0.0
    %884 = vmatpush.msra.mxu0 0.0
    %885 = vmatpush.msra.mxu0 0.0
    %886 = vmatpush.msra.mxu0 0.0
    %887 = vmatpush.msra.mxu0 0.0
    %888 = vmatpush.msra.mxu0 %v858
    %889 = vmatpush.msra.mxu0 %v854
    %890 = vmatmul.f32.gmra.mxu0 %v872
    %v891 = vpop.f32.mrf.mxu0
    %v892 = vadd.f32 %v869, %v891
    %893 = vdwg.mxu0
    %894 = vmatpush.msra.mxu0 0.0
    %895 = vmatpush.msra.mxu0 0.0
    %896 = vmatpush.msra.mxu0 0.0
    %897 = vmatpush.msra.mxu0 0.0
    %898 = vmatpush.msra.mxu0 0.0
    %899 = vmatpush.msra.mxu0 0.0
    %900 = vmatpush.msra.mxu0 0.0
    %901 = vmatpush.msra.mxu0 0.0
    %902 = vmatpush.msra.mxu0 0.0
    %903 = vmatpush.msra.mxu0 0.0
    %904 = vmatpush.msra.mxu0 0.0
    %905 = vmatpush.msra.mxu0 0.0
    %906 = vmatpush.msra.mxu0 0.0
    %907 = vmatpush.msra.mxu0 0.0
    %908 = vmatpush.msra.mxu0 %v859
    %909 = vmatpush.msra.mxu0 %v855
    %910 = vmatmul.f32.gmra.mxu0 %v872
    %v911 = vpop.f32.mrf.mxu0
    %v912 = vadd.f32 %v869, %v911
    %913 = vdwg.mxu0
    %914 = vmatpush.msra.mxu0 0.0
    %915 = vmatpush.msra.mxu0 0.0
    %916 = vmatpush.msra.mxu0 0.0
    %917 = vmatpush.msra.mxu0 0.0
    %918 = vmatpush.msra.mxu0 0.0
    %919 = vmatpush.msra.mxu0 0.0
    %920 = vmatpush.msra.mxu0 0.0
    %921 = vmatpush.msra.mxu0 0.0
    %922 = vmatpush.msra.mxu0 0.0
    %923 = vmatpush.msra.mxu0 0.0
    %924 = vmatpush.msra.mxu0 0.0
    %925 = vmatpush.msra.mxu0 0.0
    %926 = vmatpush.msra.mxu0 0.0
    %927 = vmatpush.msra.mxu0 0.0
    %928 = vmatpush.msra.mxu0 %v860
    %929 = vmatpush.msra.mxu0 %v856
    %930 = vmatmul.f32.gmra.mxu0 %v872
    %v931 = vpop.f32.mrf.mxu0
    %v932 = vadd.f32 %v869, %v931
    %933 = vdwg.mxu0
    %934 = vmatpush.msra.mxu0 0.0
    %935 = vmatpush.msra.mxu0 0.0
    %936 = vmatpush.msra.mxu0 0.0
    %937 = vmatpush.msra.mxu0 0.0
    %938 = vmatpush.msra.mxu0 0.0
    %939 = vmatpush.msra.mxu0 0.0
    %940 = vmatpush.msra.mxu0 0.0
    %941 = vmatpush.msra.mxu0 0.0
    %942 = vmatpush.msra.mxu0 0.0
    %943 = vmatpush.msra.mxu0 0.0
    %944 = vmatpush.msra.mxu0 0.0
    %945 = vmatpush.msra.mxu0 0.0
    %946 = vmatpush.msra.mxu0 0.0
    %947 = vmatpush.msra.mxu0 0.0
    %948 = vmatpush.msra.mxu0 %v861
    %949 = vmatpush.msra.mxu0 %v857
    %950 = vmatmul.f32.gmra.mxu0 %v872
    %v951 = vpop.f32.mrf.mxu0
    %v952 = vadd.f32 %v869, %v951
    %953 = vdwg.mxu0
    %v954 = vxor.u32 %v892, 2147483648
    %v955 = vxor.u32 %v912, 2147483648
    %v956 = vxor.u32 %v932, 2147483648
    %v957 = vxor.u32 %v952, 2147483648
    %v958 = vmul.f32 %v954, 1.442695
    %v959 = vpow.pop %v958
    %v960 = vmul.f32 %v955, 1.442695
    %v961 = vpow.pop %v960
    %v962 = vmul.f32 %v956, 1.442695
    %v963 = vpow.pop %v962
    %v964 = vmul.f32 %v957, 1.442695
    %v965 = vpow.pop %v964
    %v966 = vadd.f32 %v959, 1.0
    %v967 = vadd.f32 %v961, 1.0
    %v968 = vadd.f32 %v963, 1.0
    %v969 = vadd.f32 %v965, 1.0
    %v970 = vrcp.pop %v966
    %v971 = vmul.f32 %v966, %v970
    %v972 = vsub.f32 1.0, %v971
    %v973 = vmul.f32 %v970, %v972
    %v974 = vadd.f32 %v970, %v973
    %vm975 = vweird.f32 %v966
    %vm976 = vweird.f32 %v970
    %vm977 = vmor %vm975, %vm976
    %v978 = vsel %vm977, %v970, %v974
    %v979 = vand.u32 2147483647, %v966
    %vm980 = vcmp.eq.f32.partialorder %v979, 8.507059e+37
    %v981 = vand.u32 %v966, 2147483648
    %v982 = vor.u32 1.1754944e-38, %v981
    %v983 = vsel %vm980, %v982, %v978
    %v984 = vmul.f32 1.0, %v983
    %v985 = vrcp.pop %v967
    %v986 = vmul.f32 %v967, %v985
    %v987 = vsub.f32 1.0, %v986
    %v988 = vmul.f32 %v985, %v987
    %v989 = vadd.f32 %v985, %v988
    %vm990 = vweird.f32 %v967
    %vm991 = vweird.f32 %v985
    %vm992 = vmor %vm990, %vm991
    %v993 = vsel %vm992, %v985, %v989
    %v994 = vand.u32 2147483647, %v967
    %vm995 = vcmp.eq.f32.partialorder %v994, 8.507059e+37
    %v996 = vand.u32 %v967, 2147483648
    %v997 = vor.u32 1.1754944e-38, %v996
    %v998 = vsel %vm995, %v997, %v993
    %v999 = vmul.f32 1.0, %v998
    %v1000 = vrcp.pop %v968
    %v1001 = vmul.f32 %v968, %v1000
    %v1002 = vsub.f32 1.0, %v1001
    %v1003 = vmul.f32 %v1000, %v1002
    %v1004 = vadd.f32 %v1000, %v1003
    %vm1005 = vweird.f32 %v968
    %vm1006 = vweird.f32 %v1000
    %vm1007 = vmor %vm1005, %vm1006
    %v1008 = vsel %vm1007, %v1000, %v1004
    %v1009 = vand.u32 2147483647, %v968
    %vm1010 = vcmp.eq.f32.partialorder %v1009, 8.507059e+37
    %v1011 = vand.u32 %v968, 2147483648
    %v1012 = vor.u32 1.1754944e-38, %v1011
    %v1013 = vsel %vm1010, %v1012, %v1008
    %v1014 = vmul.f32 1.0, %v1013
    %v1015 = vrcp.pop %v969
    %v1016 = vmul.f32 %v969, %v1015
    %v1017 = vsub.f32 1.0, %v1016
    %v1018 = vmul.f32 %v1015, %v1017
    %v1019 = vadd.f32 %v1015, %v1018
    %vm1020 = vweird.f32 %v969
    %vm1021 = vweird.f32 %v1015
    %vm1022 = vmor %vm1020, %vm1021
    %v1023 = vsel %vm1022, %v1015, %v1019
    %v1024 = vand.u32 2147483647, %v969
    %vm1025 = vcmp.eq.f32.partialorder %v1024, 8.507059e+37
    %v1026 = vand.u32 %v969, 2147483648
    %v1027 = vor.u32 1.1754944e-38, %v1026
    %v1028 = vsel %vm1025, %v1027, %v1023
    %v1029 = vmul.f32 1.0, %v1028
    %v1034 = vrot.slane %v999, 7
    %v1035 = vrot.slane %v1014, 6
    %v1036 = vrot.slane %v1029, 5
    %vm1037 = vcmask 1040384
    %v1038 = vsel %vm1037, %v984, %v1034
    %vm1039 = vcmask 1042434
    %v1040 = vsel %vm1039, %v1035, %v1036
    %vm1041 = vcmask 1041408
    %v1042 = vsel %vm1041, %v1038, %v1040
    %v1044 = vlaneseq
    %vm1045 = vcmp.ge.s32.totalorder %v1044, 0
    %vm1046 = vcmp.lt.s32.totalorder %v1044, 512
    %vm1047 = vmand %vm1045, %vm1046
    %1048 = vst.msk [vmem:[#allocation3] sm:$0xf] %vm1047, %v1042
    // Predicated region
    $region38: #{tpu_custom_call.1} parent=1 // pred_check
      _
    $region39: #{tpu_custom_call.1} parent=1 // pred_check_branch
      %1050 = sbr.rel (0) target = $region41
    $region40: #{tpu_custom_call.1} parent=1 // pred_region
      %1052 = vsyncadd [#allocation4], 0
      %s1054 = sshll.u32 [#allocation3], 4
      %s1055 = int_to_ptr.vmem [resolvable:$true] %s1054
      %s1056 = sshll.u32 %s9, 4
      %s1057 = int_to_ptr.hbm [resolvable:$true] %s1056
      %1059 = dma.vmem_to_hbm [thread:$0]  %s1055, 64, %s1057, [#allocation4]
    $region41: #{tpu_custom_call.1} parent=1 // pred_fallthru
      _
    // Predicated region
    $region42: #{tpu_custom_call.1} parent=1 // pred_check
      _
    $region43: #{tpu_custom_call.1} parent=1 // pred_check_branch
      %1061 = sbr.rel (0) target = $region45
    $region44: #{tpu_custom_call.1} parent=1 // pred_region
      %1063 = dma.done [#allocation4], 64
    $region45: #{tpu_custom_call.1} parent=1 // pred_fallthru
      _
    %1064 = vsyncpa [#allocation4], 1

</llo_original>
